<compile_context>
chip_gen: v5e
topology: v5e:2x2
jax: 0.10.0
libtpu: 0.0.40
codegen_flags: <defaults>
</compile_context>

<pallas_src>
import math

import jax
import jax.numpy as jnp
from jax.experimental import pallas as pl
from jax.experimental.pallas import tpu as pltpu


def _time_embedding_kernel(time_ref, scale_ref, w_cos_ref, w_sin_ref, out_ref,
                           cos_sc, sin_sc):
    # Compute the phase + transcendentals once (grid step 0) and cache them in
    # VMEM scratch; later N tiles only do the two MXU matmuls.
    @pl.when(pl.program_id(0) == 0)
    def _():
        x = time_ref[...] * scale_ref[...]     # (B,1)*(1,H) -> (B,H), f32
        cos_sc[...] = jnp.cos(x)               # EUP, f32 (large phases)
        sin_sc[...] = jnp.sin(x)

    wdt = w_cos_ref.dtype                      # bf16 (default) or f32 MXU operand
    # feats = concat([cos, sin], -1); out = feats @ W.T
    #       = cos @ W[:, :H].T + sin @ W[:, H:].T  (slabs pre-transposed at init)
    out = (jnp.dot(cos_sc[...].astype(wdt), w_cos_ref[...],
                   preferred_element_type=jnp.float32)
           + jnp.dot(sin_sc[...].astype(wdt), w_sin_ref[...],
                     preferred_element_type=jnp.float32))
    out_ref[...] = out.astype(out_ref.dtype)


def prepare_time_embedding_params(scale, weight, *, weight_dtype=jnp.bfloat16):
    """Init-time parameter prep (lives in the module __init__ in production).

    scale:  (D//2, 1) buffer -> 2*pi folded in, laid out as a (1, H) row.
    weight: (D, D) nn.Linear -> two contiguous (H, D) slabs so that
            concat([cos, sin]) @ W.T == cos @ w_cos + sin @ w_sin.
    """
    H = scale.shape[0]
    scale_row = (2.0 * math.pi) * jnp.asarray(scale, jnp.float32).reshape(1, H)
    w = jnp.asarray(weight, jnp.float32)
    w_cos = w[:, :H].T.astype(weight_dtype)    # (H, D), contiguous
    w_sin = w[:, H:].T.astype(weight_dtype)    # (H, D), contiguous
    return scale_row, w_cos, w_sin


def _pick_tile_n(D, H, w_bytes, vmem_weight_budget):
    """Largest multiple-of-128 divisor of D whose double-buffered weight-slab
    footprint fits the budget; whole D (grid=(1,)) whenever it fits."""
    if D % 128 != 0:
        return D                               # tiny / ragged D: one full block

    def slab_footprint(tn):                    # 2 slabs x 2 pipeline buffers
        return 2 * 2 * H * tn * w_bytes

    if slab_footprint(D) <= vmem_weight_budget:
        return D                               # no tiling, no per-step overhead
    candidates = [c for c in range(128, D + 1, 128) if D % c == 0]
    for tn in sorted(candidates, reverse=True):
        if slab_footprint(tn) <= vmem_weight_budget:
            return tn
    return 128


def time_embedding_apply(time, scale_row, w_cos, w_sin, *,
                         vmem_weight_budget=24 * 1024 * 1024):
    B = time.shape[0]
    H = scale_row.shape[1]
    D = w_cos.shape[1]
    w_bytes = jnp.dtype(w_cos.dtype).itemsize
    t2 = time.reshape(B, 1).astype(jnp.float32)

    tn = _pick_tile_n(D, H, w_bytes, vmem_weight_budget)
    grid = (D // tn,)

    # Explicit VMEM budget: double-buffered weight slabs + double-buffered
    # output tile + cos/sin scratch + small padded inputs, with headroom.
    bp = max(B, 8)
    hp = max(H, 128)
    step_bytes = (2 * 2 * H * tn * w_bytes        # w_cos + w_sin, 2 buffers each
                  + 2 * bp * tn * 4               # out tile, double-buffered
                  + 2 * bp * hp * 4               # cos/sin scratch
                  + bp * 128 * 4 + 8 * hp * 4)    # time column + scale row
    vmem_limit = min(int(step_bytes * 1.5) + (2 << 20), 64 * 1024 * 1024)

    cost = pl.CostEstimate(
        flops=4 * B * H * D,                      # two (B,H)@(H,D) matmuls
        transcendentals=2 * B * H,                # sin + cos (computed once)
        bytes_accessed=(t2.size * 4 + scale_row.size * 4
                        + w_cos.nbytes + w_sin.nbytes + B * D * 4),
    )

    return pl.pallas_call(
        _time_embedding_kernel,
        out_shape=jax.ShapeDtypeStruct((B, D), jnp.float32),
        grid_spec=pltpu.PrefetchScalarGridSpec(
            num_scalar_prefetch=0,
            grid=grid,
            in_specs=[
                pl.BlockSpec((B, 1), lambda j: (0, 0)),   # time column
                pl.BlockSpec((1, H), lambda j: (0, 0)),   # 2*pi * scale.T row
                pl.BlockSpec((H, tn), lambda j: (0, j)),  # w_cos N-tile
                pl.BlockSpec((H, tn), lambda j: (0, j)),  # w_sin N-tile
            ],
            out_specs=pl.BlockSpec((B, tn), lambda j: (0, j)),
            scratch_shapes=[pltpu.VMEM((B, H), jnp.float32),   # cos cache
                            pltpu.VMEM((B, H), jnp.float32)],  # sin cache
        ),
        compiler_params=pltpu.CompilerParams(
            # "arbitrary": the cos/sin scratch is initialized at step 0 and
            # reused by later N tiles (cross-iteration dependency).
            dimension_semantics=("arbitrary",),
            vmem_limit_bytes=vmem_limit,
        ),
        cost_estimate=cost,
    )(t2, scale_row, w_cos, w_sin)


def time_embedding(time, scale, weight, *, weight_dtype=jnp.bfloat16,
                   vmem_weight_budget=24 * 1024 * 1024):
    """Convenience one-shot wrapper.  In production, call
    prepare_time_embedding_params() once at init and reuse the slabs."""
    params = prepare_time_embedding_params(scale, weight,
                                           weight_dtype=weight_dtype)
    return time_embedding_apply(time, *params,
                                vmem_weight_budget=vmem_weight_budget)


def time_embedding_ref(time, scale, weight):
    """Pure-JAX reference mirroring the PyTorch forward."""
    x = 2.0 * math.pi * (time[:, None] @ scale.T)            # (B, H)
    x = jnp.concatenate([jnp.cos(x), jnp.sin(x)], axis=-1)   # (B, D)
    return x @ weight.T


if __name__ == "__main__":
    B = 8            # batch of timesteps (multiple of 8 sublanes)
    D = 256          # time_dimension (multiple of 128 -> lane-dense stores)
    H = D // 2

    key = jax.random.PRNGKey(0)
    k_time, k_scale, k_w = jax.random.split(key, 3)

    # Diffusion-style timesteps in [0, 1000).
    time = jax.random.uniform(k_time, (B,), dtype=jnp.float32) * 1000.0
    # register_buffer('scale', torch.randn([D//2, 1]))
    scale = jax.random.normal(k_scale, (H, 1), dtype=jnp.float32)
    # nn.Linear(D, D, bias=False) weight (kaiming-like uniform bound)
    bound = 1.0 / math.sqrt(D)
    weight = jax.random.uniform(k_w, (D, D), dtype=jnp.float32,
                                minval=-bound, maxval=bound)

    ref = time_embedding_ref(time, scale, weight)

    # Init-time prep is hoisted out of the forward path: prep once, apply many.
    params_f32 = prepare_time_embedding_params(scale, weight,
                                               weight_dtype=jnp.float32)
    params_bf16 = prepare_time_embedding_params(scale, weight,
                                                weight_dtype=jnp.bfloat16)

    # f32 weight path.  D=256 fits the VMEM budget -> grid=(1,), no tiling.
    out_f32 = jax.block_until_ready(time_embedding_apply(time, *params_f32))
    assert out_f32.shape == (B, D)
    # Phases reach ~2e4 rad; f32 argument quantization bounds sin/cos to ~1e-3,
    # so tolerance is set to the f32-phase error band, not tighter.
    assert jnp.allclose(out_f32, ref, atol=1e-2, rtol=1e-2), \
        "f32 mismatch vs reference"

    # Default (bf16 weight slabs, f32 accumulate) path.
    out_bf16 = jax.block_until_ready(time_embedding_apply(time, *params_bf16))
    assert out_bf16.shape == (B, D)
    assert jnp.allclose(out_bf16, ref, atol=5e-2, rtol=5e-2), \
        "bf16 mismatch vs reference"

    print("KERNEL_OK")
</pallas_src>

<mosaic_0001>
module attributes {stable_mosaic.version = 11 : i64} {
  func.func @_time_embedding_kernel(%arg0: i32, %arg1: memref<8x1xf32, #tpu.memory_space<vmem>>, %arg2: memref<1x128xf32, #tpu.memory_space<vmem>>, %arg3: memref<128x256xf32, #tpu.memory_space<vmem>>, %arg4: memref<128x256xf32, #tpu.memory_space<vmem>>, %arg5: memref<8x256xf32, #tpu.memory_space<vmem>>, %arg6: memref<8x128xf32, #tpu.memory_space<vmem>>, %arg7: memref<8x128xf32, #tpu.memory_space<vmem>>) attributes {dimension_semantics = [#tpu.dimension_semantics<arbitrary>], iteration_bounds = array<i64: 1>, scalar_prefetch = 0 : i64, scratch_operands = 2 : i64, tpu.core_type = #tpu.core_type<tc>, window_params = [{pipeline_mode = #tpu.pipeline_mode<synchronous>, transform_indices = @transform_0, window_bounds = array<i64: 8, 1>}, {pipeline_mode = #tpu.pipeline_mode<synchronous>, transform_indices = @transform_1, window_bounds = array<i64: 1, 128>}, {transform_indices = @transform_2, window_bounds = array<i64: 128, 256>}, {transform_indices = @transform_3, window_bounds = array<i64: 128, 256>}, {transform_indices = @transform_4, window_bounds = array<i64: 8, 256>}]} {
    %c0_i32 = arith.constant 0 : i32
    %0 = arith.cmpi eq, %arg0, %c0_i32 : i32
    %1 = arith.extui %0 : i1 to i32
    %c0_i32_0 = arith.constant 0 : i32
    %2 = arith.cmpi ne, %1, %c0_i32_0 : i32
    scf.if %2 {
      %c0_11 = arith.constant 0 : index
      %c0_12 = arith.constant 0 : index
      %11 = vector.load %arg1[%c0_11, %c0_12] : memref<8x1xf32, #tpu.memory_space<vmem>>, vector<8x1xf32>
      %c0_13 = arith.constant 0 : index
      %c0_14 = arith.constant 0 : index
      %12 = vector.load %arg2[%c0_13, %c0_14] : memref<1x128xf32, #tpu.memory_space<vmem>>, vector<1x128xf32>
      %13 = vector.broadcast %11 : vector<8x1xf32> to vector<8x128xf32>
      %14 = vector.broadcast %12 : vector<1x128xf32> to vector<8x128xf32>
      %15 = arith.mulf %13, %14 : vector<8x128xf32>
      %16 = math.cos %15 : vector<8x128xf32>
      %c0_15 = arith.constant 0 : index
      %c0_16 = arith.constant 0 : index
      %17 = vector.load %arg6[%c0_15, %c0_16] : memref<8x128xf32, #tpu.memory_space<vmem>>, vector<8x128xf32>
      tpu.vector_store %arg6[%c0_15, %c0_16], %16 {strides = array<i32>} : memref<8x128xf32, #tpu.memory_space<vmem>>, vector<8x128xf32>,
      %18 = math.sin %15 : vector<8x128xf32>
      %c0_17 = arith.constant 0 : index
      %c0_18 = arith.constant 0 : index
      %19 = vector.load %arg7[%c0_17, %c0_18] : memref<8x128xf32, #tpu.memory_space<vmem>>, vector<8x128xf32>
      tpu.vector_store %arg7[%c0_17, %c0_18], %18 {strides = array<i32>} : memref<8x128xf32, #tpu.memory_space<vmem>>, vector<8x128xf32>,
    } else {
    }
    %c0 = arith.constant 0 : index
    %c0_1 = arith.constant 0 : index
    %3 = vector.load %arg6[%c0, %c0_1] : memref<8x128xf32, #tpu.memory_space<vmem>>, vector<8x128xf32>
    %c0_2 = arith.constant 0 : index
    %c0_3 = arith.constant 0 : index
    %4 = vector.load %arg3[%c0_2, %c0_3] : memref<128x256xf32, #tpu.memory_space<vmem>>, vector<128x256xf32>
    %cst = arith.constant dense<0.000000e+00> : vector<8x256xf32>
    %5 = tpu.matmul %3, %4, %cst {dimension_numbers = #tpu.dot_dimension_numbers<[1], [0], [0], [1], [0, 0, 1, 1], [], []>} : vector<8x128xf32>, vector<128x256xf32>, vector<8x256xf32> -> vector<8x256xf32>
    %c0_4 = arith.constant 0 : index
    %c0_5 = arith.constant 0 : index
    %6 = vector.load %arg7[%c0_4, %c0_5] : memref<8x128xf32, #tpu.memory_space<vmem>>, vector<8x128xf32>
    %c0_6 = arith.constant 0 : index
    %c0_7 = arith.constant 0 : index
    %7 = vector.load %arg4[%c0_6, %c0_7] : memref<128x256xf32, #tpu.memory_space<vmem>>, vector<128x256xf32>
    %cst_8 = arith.constant dense<0.000000e+00> : vector<8x256xf32>
    %8 = tpu.matmul %6, %7, %cst_8 {dimension_numbers = #tpu.dot_dimension_numbers<[1], [0], [0], [1], [0, 0, 1, 1], [], []>} : vector<8x128xf32>, vector<128x256xf32>, vector<8x256xf32> -> vector<8x256xf32>
    %9 = arith.addf %5, %8 : vector<8x256xf32>
    %c0_9 = arith.constant 0 : index
    %c0_10 = arith.constant 0 : index
    %10 = vector.load %arg5[%c0_9, %c0_10] : memref<8x256xf32, #tpu.memory_space<vmem>>, vector<8x256xf32>
    tpu.vector_store %arg5[%c0_9, %c0_10], %9 {strides = array<i32>} : memref<8x256xf32, #tpu.memory_space<vmem>>, vector<8x256xf32>,
    return
  }
  func.func @transform_0(%arg0: i32) -> (i32, i32) {
    %c0_i32 = arith.constant 0 : i32
    %c0_i32_0 = arith.constant 0 : i32
    %c0_i32_1 = arith.constant 0 : i32
    return %c0_i32, %c0_i32_0 : i32, i32
  }
  func.func @transform_1(%arg0: i32) -> (i32, i32) {
    %c0_i32 = arith.constant 0 : i32
    %c0_i32_0 = arith.constant 0 : i32
    %c0_i32_1 = arith.constant 0 : i32
    return %c0_i32, %c0_i32_0 : i32, i32
  }
  func.func @transform_2(%arg0: i32) -> (i32, i32) {
    %c0_i32 = arith.constant 0 : i32
    %c0_i32_0 = arith.constant 0 : i32
    return %c0_i32, %arg0 : i32, i32
  }
  func.func @transform_3(%arg0: i32) -> (i32, i32) {
    %c0_i32 = arith.constant 0 : i32
    %c0_i32_0 = arith.constant 0 : i32
    return %c0_i32, %arg0 : i32, i32
  }
  func.func @transform_4(%arg0: i32) -> (i32, i32) {
    %c0_i32 = arith.constant 0 : i32
    %c0_i32_0 = arith.constant 0 : i32
    return %c0_i32, %arg0 : i32, i32
  }
}

</mosaic_0001>

<llo_original>
// kernel: tpu_custom_call.1
$region0: #{tpu_custom_call.1}
  #allocation0 [shape = 'u32[]', space=smem, size = 0x4, offset = 0x4, fixed_abs, tag = 'smem constant byte address 0x4 - core index']
  #allocation1 [shape = 'u32[72,128]{1,0:T(1,128)}', space=vmem, size = 0x9000, scoped, tag = 'internal scratch']
  #allocation2 [shape = 'f32[8,128]{1,0:T(8,128)}', space=vmem, size = 0x1000, scoped, tag = 'scratch operand']
  #allocation3 [shape = 'f32[8,128]{1,0:T(8,128)}', space=vmem, size = 0x1000, scoped, tag = 'scratch operand']
  %s0 = inlined_call_operand.vmem [shape: f32[8,1], index: 0, kind: input, shape index: {}]
  %s1 = inlined_call_operand.vmem [shape: f32[1,128], index: 1, kind: input, shape index: {}]
  %s2 = inlined_call_operand.hbm [shape: f32[128,256], index: 2, kind: input, shape index: {}]
  %s3 = inlined_call_operand.hbm [shape: f32[128,256], index: 3, kind: input, shape index: {}]
  %s4 = inlined_call_operand.hbm [shape: f32[8,256], index: 4, kind: output, shape index: {}]
  %s5 = sld [smem:[#allocation0]]
  $region38: #{tpu_custom_call.1} parent=0
    _
  %s7 = ssub.s32 1, %s5
  %s8 = scalar_select 0, %s7, %s5
  $region1: #{tpu_custom_call.1} parent=0
    #allocation4 [shape = 'u8[131072]{0}', space=vmem, size = 0x20000, scoped, tag = 'input window, operand 2, single buffered']
    #allocation5 [shape = 's32[1]{0}', space=sflag, size = 0x4, scoped, tag = 'scoped memory for tpu_custom_call.1']
    #allocation6 [shape = 's32[1]{0}', space=sflag, size = 0x4, scoped, tag = 'scoped memory for tpu_custom_call.1']
    #allocation7 [shape = 'u8[131072]{0}', space=vmem, size = 0x20000, scoped, tag = 'input window, operand 3, single buffered']
    #allocation8 [shape = 's32[1]{0}', space=sflag, size = 0x4, scoped, tag = 'scoped memory for tpu_custom_call.1']
    #allocation9 [shape = 'u8[8192]{0}', space=vmem, size = 0x2000, scoped, tag = 'output window, operand 0, single buffered']
    %9 = vsyncpa [#allocation5], 0
    %10 = vsyncpa [#allocation8], 0
    %11 = vsyncpa [#allocation6], 0
    // Predicated region
    $region2: #{tpu_custom_call.1} parent=1 // pred_check
      _
    $region3: #{tpu_custom_call.1} parent=1 // pred_check_branch
      %13 = sbr.rel (0) target = $region5
    $region4: #{tpu_custom_call.1} parent=1 // pred_region
      _
    $region5: #{tpu_custom_call.1} parent=1 // pred_fallthru
      _
    // Predicated region
    $region6: #{tpu_custom_call.1} parent=1 // pred_check
      _
    $region7: #{tpu_custom_call.1} parent=1 // pred_check_branch
      %15 = sbr.rel (0) target = $region9
    $region8: #{tpu_custom_call.1} parent=1 // pred_region
      _
    $region9: #{tpu_custom_call.1} parent=1 // pred_fallthru
      _
    // Predicated region
    $region10: #{tpu_custom_call.1} parent=1 // pred_check
      _
    $region11: #{tpu_custom_call.1} parent=1 // pred_check_branch
      %17 = sbr.rel (0) target = $region13
    $region12: #{tpu_custom_call.1} parent=1 // pred_region
      %19 = vsyncadd [#allocation5], 0
      %s20 = sshll.u32 %s2, 4
      %s21 = int_to_ptr.hbm [resolvable:$true] %s20
      %s22 = sshll.u32 [#allocation4], 4
      %s23 = int_to_ptr.vmem [resolvable:$true] %s22
      %28 = dma.hbm_to_vmem [thread:$0]  %s21, 4096, %s23, [#allocation5], 256, 256, 16
    $region13: #{tpu_custom_call.1} parent=1 // pred_fallthru
      _
    // Predicated region
    $region14: #{tpu_custom_call.1} parent=1 // pred_check
      _
    $region15: #{tpu_custom_call.1} parent=1 // pred_check_branch
      %30 = sbr.rel (0) target = $region17
    $region16: #{tpu_custom_call.1} parent=1 // pred_region
      %32 = vsyncadd [#allocation8], 0
      %s33 = sshll.u32 %s3, 4
      %s34 = int_to_ptr.hbm [resolvable:$true] %s33
      %s35 = sshll.u32 [#allocation7], 4
      %s36 = int_to_ptr.vmem [resolvable:$true] %s35
      %41 = dma.hbm_to_vmem [thread:$0]  %s34, 4096, %s36, [#allocation8], 256, 256, 16
    $region17: #{tpu_custom_call.1} parent=1 // pred_fallthru
      _
    // Predicated region
    $region18: #{tpu_custom_call.1} parent=1 // pred_check
      _
    $region19: #{tpu_custom_call.1} parent=1 // pred_check_branch
      %43 = sbr.rel (0) target = $region21
    $region20: #{tpu_custom_call.1} parent=1 // pred_region
      %45 = dma.done [#allocation5], 4096
    $region21: #{tpu_custom_call.1} parent=1 // pred_fallthru
      _
    // Predicated region
    $region22: #{tpu_custom_call.1} parent=1 // pred_check
      _
    $region23: #{tpu_custom_call.1} parent=1 // pred_check_branch
      %47 = sbr.rel (0) target = $region25
    $region24: #{tpu_custom_call.1} parent=1 // pred_region
      %49 = dma.done [#allocation8], 4096
    $region25: #{tpu_custom_call.1} parent=1 // pred_fallthru
      _
    %p50 = scmp.eq.s32.totalorder 0, 0
    // Predicated region
    $region26: #{tpu_custom_call.1} parent=1 // pred_check
      %p51 = pneg %p50
    $region27: #{tpu_custom_call.1} parent=1 // pred_check_branch
      %53 = sbr.rel (%p51) target = $region29
    $region28: #{tpu_custom_call.1} parent=1 // pred_region
      %v54 = vld [vmem:[%s0] sm:$0xff]
      %v55 = vld [vmem:[%s1] sm:$0x1]
      %57 = vset.pattern.permute.xlu0 0
      %58 = vperm.xlu0 %57, %v54
      %v59 = vpop.permute.xlu0 %58
      %v62 = vperm.slane %v55, 0
      %v64 = vmul.f32 %v59, %v62
      %v65 = vand.u32 2147483647, %v64
      %vm66 = vcmp.le.f32.partialorder %v65, 0.7853982
      %vm67 = vcmp.lt.s32.totalorder %v64, 0
      %v68 = vand.u32 %v64, 2139095040
      %v69 = vshrl.u32 %v68, 23
      %v70 = vsub.s32 %v69, 127
      %v71 = vand.u32 2147483647, %v64
      %v72 = vand.u32 %v71, 8388607
      %v73 = vor.u32 %v72, 8388608
      %v74 = vsub.s32 0, %v73
      %v75 = vadd.s32 %v70, 1
      %vm76 = vcmp.gt.s32.totalorder %v75, 0
      %v77 = vsel %vm76, %v75, 0
      %v78 = vshrl.u32 %v77, 5
      %v79 = vand.u32 %v77, 31
      %v80 = vsub.s32 32, %v79
      %v81 = vshrl.u32 683565275, %v80
      %v82 = vshll.u32 683565275, %v79
      %v83 = vshrl.u32 2475754826, %v80
      %v84 = vor.u32 %v82, %v83
      %v85 = vshll.u32 2475754826, %v79
      %v86 = vshrl.u32 2131351028, %v80
      %v87 = vor.u32 %v85, %v86
      %v88 = vshll.u32 2131351028, %v79
      %v89 = vshrl.u32 2102212464, %v80
      %v90 = vor.u32 %v88, %v89
      %v91 = vshll.u32 2102212464, %v79
      %v92 = vshrl.u32 920167782, %v80
      %v93 = vor.u32 %v91, %v92
      %v94 = vshll.u32 920167782, %v79
      %v95 = vshrl.u32 1326507024, %v80
      %v96 = vor.u32 %v94, %v95
      %vm97 = vcmp.lt.s32.totalorder %v78, 1
      %vm98 = vcmp.lt.s32.totalorder %v78, 2
      %vm99 = vcmp.lt.s32.totalorder %v78, 3
      %vm100 = vcmp.lt.s32.totalorder %v78, 4
      %v101 = vsel %vm97, %v81, %v84
      %v102 = vsel %vm100, %v90, 2102212464
      %v103 = vsel %vm99, %v87, %v102
      %v104 = vsel %vm98, %v101, %v103
      %v105 = vsel %vm97, %v84, %v87
      %v106 = vsel %vm100, %v93, 920167782
      %v107 = vsel %vm99, %v90, %v106
      %v108 = vsel %vm98, %v105, %v107
      %v109 = vsel %vm97, %v87, %v90
      %v110 = vsel %vm100, %v96, 1326507024
      %v111 = vsel %vm99, %v93, %v110
      %v112 = vsel %vm98, %v109, %v111
      %v113 = vshll.u32 %v73, 8
      %v114 = vand.u32 %v113, 65535
      %v115 = vshrl.u32 %v113, 16
      %v116 = vand.u32 %v112, 65535
      %v117 = vshrl.u32 %v112, 16
      %v118 = vmul.u32 %v114, %v116
      %v119 = vmul.u32 %v114, %v117
      %v120 = vmul.u32 %v115, %v116
      %v121 = vmul.u32 %v115, %v117
      %v122 = vshll.u32 %v119, 16
      %v123 = vshrl.u32 %v119, 16
      %v124 = vshll.u32 %v120, 16
      %v125 = vshrl.u32 %v120, 16
      %vm126 = vc.u32 %v118, %v122
      %v127 = vsel %vm126, 1, 0
      %v128 = vadd.s32 %v118, %v122
      %v129 = vadd.s32 %v121, %v127
      %vm130 = vc.u32 %v128, %v124
      %v131 = vsel %vm130, 1, 0
      %v132 = vadd.s32 %v128, %v124
      %v133 = vadd.s32 %v129, %v131
      %v134 = vadd.s32 %v133, %v123
      %v135 = vadd.s32 %v134, %v125
      %v136 = vand.u32 %v113, 65535
      %v137 = vshrl.u32 %v113, 16
      %v138 = vand.u32 %v108, 65535
      %v139 = vshrl.u32 %v108, 16
      %v140 = vmul.u32 %v136, %v138
      %v141 = vmul.u32 %v136, %v139
      %v142 = vmul.u32 %v137, %v138
      %v143 = vmul.u32 %v137, %v139
      %v144 = vshll.u32 %v141, 16
      %v145 = vshrl.u32 %v141, 16
      %v146 = vshll.u32 %v142, 16
      %v147 = vshrl.u32 %v142, 16
      %vm148 = vc.u32 %v140, %v144
      %v149 = vsel %vm148, 1, 0
      %v150 = vadd.s32 %v140, %v144
      %v151 = vadd.s32 %v143, %v149
      %vm152 = vc.u32 %v150, %v146
      %v153 = vsel %vm152, 1, 0
      %v154 = vadd.s32 %v150, %v146
      %v155 = vadd.s32 %v151, %v153
      %v156 = vadd.s32 %v155, %v145
      %v157 = vadd.s32 %v156, %v147
      %v158 = vmul.u32 %v113, %v104
      %v159 = vadd.s32 %v135, %v154
      %vm160 = vc.u32 %v135, %v154
      %v161 = vadd.s32 %v157, 1
      %v162 = vsel %vm160, %v161, %v157
      %v163 = vadd.s32 %v158, %v162
      %v164 = vadd.s32 %v163, 536870912
      %v165 = vshrl.u32 %v164, 30
      %v166 = vshll.u32 %v165, 30
      %v167 = vsub.s32 %v163, %v166
      %vm168 = vcmp.lt.s32.totalorder %v167, 0
      %v169 = vsub.s32 0, %v167
      %v170 = vsel %vm168, %v169, %v167
      %v171 = vclz %v170
      %v172 = vsub.s32 %v171, 2
      %vm173 = vcmp.gt.s32.totalorder 0, %v172
      %v174 = vsel %vm173, 0, %v172
      %v175 = vsub.s32 32, %v174
      %v176 = vshll.u32 %v167, %v174
      %v177 = vshrl.u32 %v159, %v175
      %v178 = vor.u32 %v176, %v177
      %v179 = vsub.s32 4294967266, %v174
      %v180 = vadd.s32 %v179, 127
      %v181 = vshll.u32 %v180, 23
      %v182 = vor.u32 4788187, %v181
      %v183 = vand.u32 2147483647, %v182
      %v185 = vcvt.s32.f32 %v178
      %v186 = vmul.f32 %v185, %v183
      %v187 = vxor.u32 %v186, 2147483648
      %v188 = vsel %vm67, %v187, %v186
      %v189 = vsub.s32 4, %v165
      %v190 = vsel %vm67, %v189, %v165
      %v191 = vsel %vm66, %v64, %v188
      %v192 = vsel %vm66, 0, %v190
      %v193 = vmul.f32 %v191, %v191
      %v194 = vmul.f32 %v193, -0.001358992
      %v195 = vadd.f32 %v194, 0.041655596
      %v196 = vmul.f32 %v193, %v195
      %v197 = vadd.f32 %v196, -0.4999988
      %v198 = vmul.f32 %v193, %v197
      %v199 = vadd.f32 1.0, %v198
      %v200 = vmul.f32 %v191, %v191
      %v201 = vmul.f32 %v200, -0.00019511016
      %v202 = vadd.f32 %v201, 0.008332121
      %v203 = vmul.f32 %v200, %v202
      %v204 = vadd.f32 %v203, -0.16666654
      %v205 = vmul.f32 %v200, %v204
      %v206 = vadd.f32 %v205, 1.0
      %v207 = vmul.f32 %v206, %v191
      %vm208 = vweird.f32 %v64
      %v209 = vand.u32 %v192, 3
      %vm210 = vcmp.lt.s32.totalorder %v209, 2
      %vm211 = vcmp.eq.s32.totalorder %v209, 0
      %v212 = vxor.u32 %v207, 2147483648
      %v213 = vsel %vm211, %v199, %v212
      %vm214 = vcmp.eq.s32.totalorder %v209, 2
      %v215 = vxor.u32 %v199, 2147483648
      %v216 = vsel %vm214, %v215, %v207
      %v217 = vsel %vm210, %v213, %v216
      %v218 = vsel %vm208, nan, %v217
      %219 = vst [vmem:[#allocation2] sm:$0xff] %v218
      %v220 = vand.u32 2147483647, %v64
      %vm221 = vcmp.le.f32.partialorder %v220, 0.7853982
      %vm222 = vcmp.lt.s32.totalorder %v64, 0
      %v223 = vand.u32 %v64, 2139095040
      %v224 = vshrl.u32 %v223, 23
      %v225 = vsub.s32 %v224, 127
      %v226 = vand.u32 2147483647, %v64
      %v227 = vand.u32 %v226, 8388607
      %v228 = vor.u32 %v227, 8388608
      %v229 = vsub.s32 0, %v228
      %v230 = vadd.s32 %v225, 1
      %vm231 = vcmp.gt.s32.totalorder %v230, 0
      %v232 = vsel %vm231, %v230, 0
      %v233 = vshrl.u32 %v232, 5
      %v234 = vand.u32 %v232, 31
      %v235 = vsub.s32 32, %v234
      %v236 = vshrl.u32 683565275, %v235
      %v237 = vshll.u32 683565275, %v234
      %v238 = vshrl.u32 2475754826, %v235
      %v239 = vor.u32 %v237, %v238
      %v240 = vshll.u32 2475754826, %v234
      %v241 = vshrl.u32 2131351028, %v235
      %v242 = vor.u32 %v240, %v241
      %v243 = vshll.u32 2131351028, %v234
      %v244 = vshrl.u32 2102212464, %v235
      %v245 = vor.u32 %v243, %v244
      %v246 = vshll.u32 2102212464, %v234
      %v247 = vshrl.u32 920167782, %v235
      %v248 = vor.u32 %v246, %v247
      %v249 = vshll.u32 920167782, %v234
      %v250 = vshrl.u32 1326507024, %v235
      %v251 = vor.u32 %v249, %v250
      %vm252 = vcmp.lt.s32.totalorder %v233, 1
      %vm253 = vcmp.lt.s32.totalorder %v233, 2
      %vm254 = vcmp.lt.s32.totalorder %v233, 3
      %vm255 = vcmp.lt.s32.totalorder %v233, 4
      %v256 = vsel %vm252, %v236, %v239
      %v257 = vsel %vm255, %v245, 2102212464
      %v258 = vsel %vm254, %v242, %v257
      %v259 = vsel %vm253, %v256, %v258
      %v260 = vsel %vm252, %v239, %v242
      %v261 = vsel %vm255, %v248, 920167782
      %v262 = vsel %vm254, %v245, %v261
      %v263 = vsel %vm253, %v260, %v262
      %v264 = vsel %vm252, %v242, %v245
      %v265 = vsel %vm255, %v251, 1326507024
      %v266 = vsel %vm254, %v248, %v265
      %v267 = vsel %vm253, %v264, %v266
      %v268 = vshll.u32 %v228, 8
      %v269 = vand.u32 %v268, 65535
      %v270 = vshrl.u32 %v268, 16
      %v271 = vand.u32 %v267, 65535
      %v272 = vshrl.u32 %v267, 16
      %v273 = vmul.u32 %v269, %v271
      %v274 = vmul.u32 %v269, %v272
      %v275 = vmul.u32 %v270, %v271
      %v276 = vmul.u32 %v270, %v272
      %v277 = vshll.u32 %v274, 16
      %v278 = vshrl.u32 %v274, 16
      %v279 = vshll.u32 %v275, 16
      %v280 = vshrl.u32 %v275, 16
      %vm281 = vc.u32 %v273, %v277
      %v282 = vsel %vm281, 1, 0
      %v283 = vadd.s32 %v273, %v277
      %v284 = vadd.s32 %v276, %v282
      %vm285 = vc.u32 %v283, %v279
      %v286 = vsel %vm285, 1, 0
      %v287 = vadd.s32 %v283, %v279
      %v288 = vadd.s32 %v284, %v286
      %v289 = vadd.s32 %v288, %v278
      %v290 = vadd.s32 %v289, %v280
      %v291 = vand.u32 %v268, 65535
      %v292 = vshrl.u32 %v268, 16
      %v293 = vand.u32 %v263, 65535
      %v294 = vshrl.u32 %v263, 16
      %v295 = vmul.u32 %v291, %v293
      %v296 = vmul.u32 %v291, %v294
      %v297 = vmul.u32 %v292, %v293
      %v298 = vmul.u32 %v292, %v294
      %v299 = vshll.u32 %v296, 16
      %v300 = vshrl.u32 %v296, 16
      %v301 = vshll.u32 %v297, 16
      %v302 = vshrl.u32 %v297, 16
      %vm303 = vc.u32 %v295, %v299
      %v304 = vsel %vm303, 1, 0
      %v305 = vadd.s32 %v295, %v299
      %v306 = vadd.s32 %v298, %v304
      %vm307 = vc.u32 %v305, %v301
      %v308 = vsel %vm307, 1, 0
      %v309 = vadd.s32 %v305, %v301
      %v310 = vadd.s32 %v306, %v308
      %v311 = vadd.s32 %v310, %v300
      %v312 = vadd.s32 %v311, %v302
      %v313 = vmul.u32 %v268, %v259
      %v314 = vadd.s32 %v290, %v309
      %vm315 = vc.u32 %v290, %v309
      %v316 = vadd.s32 %v312, 1
      %v317 = vsel %vm315, %v316, %v312
      %v318 = vadd.s32 %v313, %v317
      %v319 = vadd.s32 %v318, 536870912
      %v320 = vshrl.u32 %v319, 30
      %v321 = vshll.u32 %v320, 30
      %v322 = vsub.s32 %v318, %v321
      %vm323 = vcmp.lt.s32.totalorder %v322, 0
      %v324 = vsub.s32 0, %v322
      %v325 = vsel %vm323, %v324, %v322
      %v326 = vclz %v325
      %v327 = vsub.s32 %v326, 2
      %vm328 = vcmp.gt.s32.totalorder 0, %v327
      %v329 = vsel %vm328, 0, %v327
      %v330 = vsub.s32 32, %v329
      %v331 = vshll.u32 %v322, %v329
      %v332 = vshrl.u32 %v314, %v330
      %v333 = vor.u32 %v331, %v332
      %v334 = vsub.s32 4294967266, %v329
      %v335 = vadd.s32 %v334, 127
      %v336 = vshll.u32 %v335, 23
      %v337 = vor.u32 4788187, %v336
      %v338 = vand.u32 2147483647, %v337
      %v340 = vcvt.s32.f32 %v333
      %v341 = vmul.f32 %v340, %v338
      %v342 = vxor.u32 %v341, 2147483648
      %v343 = vsel %vm222, %v342, %v341
      %v344 = vsub.s32 4, %v320
      %v345 = vsel %vm222, %v344, %v320
      %v346 = vsel %vm221, %v64, %v343
      %v347 = vsel %vm221, 0, %v345
      %v348 = vmul.f32 %v346, %v346
      %v349 = vmul.f32 %v348, -0.001358992
      %v350 = vadd.f32 %v349, 0.041655596
      %v351 = vmul.f32 %v348, %v350
      %v352 = vadd.f32 %v351, -0.4999988
      %v353 = vmul.f32 %v348, %v352
      %v354 = vadd.f32 1.0, %v353
      %v355 = vmul.f32 %v346, %v346
      %v356 = vmul.f32 %v355, -0.00019511016
      %v357 = vadd.f32 %v356, 0.008332121
      %v358 = vmul.f32 %v355, %v357
      %v359 = vadd.f32 %v358, -0.16666654
      %v360 = vmul.f32 %v355, %v359
      %v361 = vadd.f32 %v360, 1.0
      %v362 = vmul.f32 %v361, %v346
      %vm363 = vweird.f32 %v64
      %v364 = vadd.s32 %v347, 3
      %v365 = vand.u32 %v364, 3
      %vm366 = vcmp.lt.s32.totalorder %v365, 2
      %vm367 = vcmp.eq.s32.totalorder %v365, 0
      %v368 = vxor.u32 %v362, 2147483648
      %v369 = vsel %vm367, %v354, %v368
      %vm370 = vcmp.eq.s32.totalorder %v365, 2
      %v371 = vxor.u32 %v354, 2147483648
      %v372 = vsel %vm370, %v371, %v362
      %v373 = vsel %vm366, %v369, %v372
      %v374 = vsel %vm363, nan, %v373
      %375 = vst [vmem:[#allocation3] sm:$0xff] %v374
    $region29: #{tpu_custom_call.1} parent=1 // pred_fallthru
      _
    %v376 = vld [vmem:[#allocation2] sm:$0xff]
    %v377 = vld [vmem:[#allocation4] sm:$0xff]
    %v378 = vld [vmem:[#allocation4 + $0x8] sm:$0xff]
    %v379 = vld [vmem:[#allocation4 + $0x10] sm:$0xff]
    %v380 = vld [vmem:[#allocation4 + $0x18] sm:$0xff]
    %v381 = vld [vmem:[#allocation4 + $0x20] sm:$0xff]
    %v382 = vld [vmem:[#allocation4 + $0x28] sm:$0xff]
    %v383 = vld [vmem:[#allocation4 + $0x30] sm:$0xff]
    %v384 = vld [vmem:[#allocation4 + $0x38] sm:$0xff]
    %v385 = vld [vmem:[#allocation4 + $0x40] sm:$0xff]
    %v386 = vld [vmem:[#allocation4 + $0x48] sm:$0xff]
    %v387 = vld [vmem:[#allocation4 + $0x50] sm:$0xff]
    %v388 = vld [vmem:[#allocation4 + $0x58] sm:$0xff]
    %v389 = vld [vmem:[#allocation4 + $0x60] sm:$0xff]
    %v390 = vld [vmem:[#allocation4 + $0x68] sm:$0xff]
    %v391 = vld [vmem:[#allocation4 + $0x70] sm:$0xff]
    %v392 = vld [vmem:[#allocation4 + $0x78] sm:$0xff]
    %v393 = vld [vmem:[#allocation4 + $0x80] sm:$0xff]
    %v394 = vld [vmem:[#allocation4 + $0x88] sm:$0xff]
    %v395 = vld [vmem:[#allocation4 + $0x90] sm:$0xff]
    %v396 = vld [vmem:[#allocation4 + $0x98] sm:$0xff]
    %v397 = vld [vmem:[#allocation4 + $0xa0] sm:$0xff]
    %v398 = vld [vmem:[#allocation4 + $0xa8] sm:$0xff]
    %v399 = vld [vmem:[#allocation4 + $0xb0] sm:$0xff]
    %v400 = vld [vmem:[#allocation4 + $0xb8] sm:$0xff]
    %v401 = vld [vmem:[#allocation4 + $0xc0] sm:$0xff]
    %v402 = vld [vmem:[#allocation4 + $0xc8] sm:$0xff]
    %v403 = vld [vmem:[#allocation4 + $0xd0] sm:$0xff]
    %v404 = vld [vmem:[#allocation4 + $0xd8] sm:$0xff]
    %v405 = vld [vmem:[#allocation4 + $0xe0] sm:$0xff]
    %v406 = vld [vmem:[#allocation4 + $0xe8] sm:$0xff]
    %v407 = vld [vmem:[#allocation4 + $0xf0] sm:$0xff]
    %v408 = vld [vmem:[#allocation4 + $0xf8] sm:$0xff]
    %v409 = vld [vmem:[#allocation3] sm:$0xff]
    %v410 = vld [vmem:[#allocation7] sm:$0xff]
    %v411 = vld [vmem:[#allocation7 + $0x8] sm:$0xff]
    %v412 = vld [vmem:[#allocation7 + $0x10] sm:$0xff]
    %v413 = vld [vmem:[#allocation7 + $0x18] sm:$0xff]
    %v414 = vld [vmem:[#allocation7 + $0x20] sm:$0xff]
    %v415 = vld [vmem:[#allocation7 + $0x28] sm:$0xff]
    %v416 = vld [vmem:[#allocation7 + $0x30] sm:$0xff]
    %v417 = vld [vmem:[#allocation7 + $0x38] sm:$0xff]
    %v418 = vld [vmem:[#allocation7 + $0x40] sm:$0xff]
    %v419 = vld [vmem:[#allocation7 + $0x48] sm:$0xff]
    %v420 = vld [vmem:[#allocation7 + $0x50] sm:$0xff]
    %v421 = vld [vmem:[#allocation7 + $0x58] sm:$0xff]
    %v422 = vld [vmem:[#allocation7 + $0x60] sm:$0xff]
    %v423 = vld [vmem:[#allocation7 + $0x68] sm:$0xff]
    %v424 = vld [vmem:[#allocation7 + $0x70] sm:$0xff]
    %v425 = vld [vmem:[#allocation7 + $0x78] sm:$0xff]
    %v426 = vld [vmem:[#allocation7 + $0x80] sm:$0xff]
    %v427 = vld [vmem:[#allocation7 + $0x88] sm:$0xff]
    %v428 = vld [vmem:[#allocation7 + $0x90] sm:$0xff]
    %v429 = vld [vmem:[#allocation7 + $0x98] sm:$0xff]
    %v430 = vld [vmem:[#allocation7 + $0xa0] sm:$0xff]
    %v431 = vld [vmem:[#allocation7 + $0xa8] sm:$0xff]
    %v432 = vld [vmem:[#allocation7 + $0xb0] sm:$0xff]
    %v433 = vld [vmem:[#allocation7 + $0xb8] sm:$0xff]
    %v434 = vld [vmem:[#allocation7 + $0xc0] sm:$0xff]
    %v435 = vld [vmem:[#allocation7 + $0xc8] sm:$0xff]
    %v436 = vld [vmem:[#allocation7 + $0xd0] sm:$0xff]
    %v437 = vld [vmem:[#allocation7 + $0xd8] sm:$0xff]
    %v438 = vld [vmem:[#allocation7 + $0xe0] sm:$0xff]
    %v439 = vld [vmem:[#allocation7 + $0xe8] sm:$0xff]
    %v440 = vld [vmem:[#allocation7 + $0xf0] sm:$0xff]
    %v441 = vld [vmem:[#allocation7 + $0xf8] sm:$0xff]
    %442 = vmatpush.msra.mxu0 %v440
    %443 = vmatpush.msra.mxu0 %v438
    %444 = vmatpush.msra.mxu0 %v436
    %445 = vmatpush.msra.mxu0 %v434
    %446 = vmatpush.msra.mxu0 %v432
    %447 = vmatpush.msra.mxu0 %v430
    %448 = vmatpush.msra.mxu0 %v428
    %449 = vmatpush.msra.mxu0 %v426
    %450 = vmatpush.msra.mxu0 %v424
    %451 = vmatpush.msra.mxu0 %v422
    %452 = vmatpush.msra.mxu0 %v420
    %453 = vmatpush.msra.mxu0 %v418
    %454 = vmatpush.msra.mxu0 %v416
    %455 = vmatpush.msra.mxu0 %v414
    %456 = vmatpush.msra.mxu0 %v412
    %457 = vmatpush.msra.mxu0 %v410
    %458 = vmatmul.f32.gmra.mxu0 %v409
    %v459 = vpop.f32.mrf.mxu0
    %v460 = vadd.f32 0.0, %v459
    %461 = vdwg.mxu0
    %462 = vmatpush.msra.mxu0 %v441
    %463 = vmatpush.msra.mxu0 %v439
    %464 = vmatpush.msra.mxu0 %v437
    %465 = vmatpush.msra.mxu0 %v435
    %466 = vmatpush.msra.mxu0 %v433
    %467 = vmatpush.msra.mxu0 %v431
    %468 = vmatpush.msra.mxu0 %v429
    %469 = vmatpush.msra.mxu0 %v427
    %470 = vmatpush.msra.mxu0 %v425
    %471 = vmatpush.msra.mxu0 %v423
    %472 = vmatpush.msra.mxu0 %v421
    %473 = vmatpush.msra.mxu0 %v419
    %474 = vmatpush.msra.mxu0 %v417
    %475 = vmatpush.msra.mxu0 %v415
    %476 = vmatpush.msra.mxu0 %v413
    %477 = vmatpush.msra.mxu0 %v411
    %478 = vmatmul.f32.gmra.mxu0 %v409
    %v479 = vpop.f32.mrf.mxu0
    %v480 = vadd.f32 0.0, %v479
    %481 = vdwg.mxu0
    %482 = vmatpush.msra.mxu0 %v407
    %483 = vmatpush.msra.mxu0 %v405
    %484 = vmatpush.msra.mxu0 %v403
    %485 = vmatpush.msra.mxu0 %v401
    %486 = vmatpush.msra.mxu0 %v399
    %487 = vmatpush.msra.mxu0 %v397
    %488 = vmatpush.msra.mxu0 %v395
    %489 = vmatpush.msra.mxu0 %v393
    %490 = vmatpush.msra.mxu0 %v391
    %491 = vmatpush.msra.mxu0 %v389
    %492 = vmatpush.msra.mxu0 %v387
    %493 = vmatpush.msra.mxu0 %v385
    %494 = vmatpush.msra.mxu0 %v383
    %495 = vmatpush.msra.mxu0 %v381
    %496 = vmatpush.msra.mxu0 %v379
    %497 = vmatpush.msra.mxu0 %v377
    %498 = vmatmul.f32.gmra.mxu0 %v376
    %v499 = vpop.f32.mrf.mxu0
    %v500 = vadd.f32 %v460, %v499
    %501 = vdwg.mxu0
    %502 = vmatpush.msra.mxu0 %v408
    %503 = vmatpush.msra.mxu0 %v406
    %504 = vmatpush.msra.mxu0 %v404
    %505 = vmatpush.msra.mxu0 %v402
    %506 = vmatpush.msra.mxu0 %v400
    %507 = vmatpush.msra.mxu0 %v398
    %508 = vmatpush.msra.mxu0 %v396
    %509 = vmatpush.msra.mxu0 %v394
    %510 = vmatpush.msra.mxu0 %v392
    %511 = vmatpush.msra.mxu0 %v390
    %512 = vmatpush.msra.mxu0 %v388
    %513 = vmatpush.msra.mxu0 %v386
    %514 = vmatpush.msra.mxu0 %v384
    %515 = vmatpush.msra.mxu0 %v382
    %516 = vmatpush.msra.mxu0 %v380
    %517 = vmatpush.msra.mxu0 %v378
    %518 = vmatmul.f32.gmra.mxu0 %v376
    %v519 = vpop.f32.mrf.mxu0
    %v520 = vadd.f32 %v480, %v519
    %521 = vdwg.mxu0
    %522 = vst [vmem:[#allocation9] sm:$0xff] %v500
    %523 = vst [vmem:[#allocation9 + $0x8] sm:$0xff] %v520
    // Predicated region
    $region30: #{tpu_custom_call.1} parent=1 // pred_check
      _
    $region31: #{tpu_custom_call.1} parent=1 // pred_check_branch
      %525 = sbr.rel (0) target = $region33
    $region32: #{tpu_custom_call.1} parent=1 // pred_region
      %527 = vsyncadd [#allocation6], 0
      %s529 = sshll.u32 [#allocation9], 4
      %s530 = int_to_ptr.vmem [resolvable:$true] %s529
      %s531 = sshll.u32 %s4, 4
      %s532 = int_to_ptr.hbm [resolvable:$true] %s531
      %534 = dma.vmem_to_hbm [thread:$0]  %s530, 256, %s532, [#allocation6]
    $region33: #{tpu_custom_call.1} parent=1 // pred_fallthru
      _
    // Predicated region
    $region34: #{tpu_custom_call.1} parent=1 // pred_check
      _
    $region35: #{tpu_custom_call.1} parent=1 // pred_check_branch
      %536 = sbr.rel (0) target = $region37
    $region36: #{tpu_custom_call.1} parent=1 // pred_region
      %538 = dma.done [#allocation6], 256
    $region37: #{tpu_custom_call.1} parent=1 // pred_fallthru
      _
    %539 = vsyncpa [#allocation5], 1
    %540 = vsyncpa [#allocation8], 1
    %541 = vsyncpa [#allocation6], 1

</llo_original>
